<compile_context>
chip_gen: v7x
topology: tpu7x:2x2x1
jax: 0.10.0
libtpu: 0.0.40
codegen_flags: <defaults>
</compile_context>

<pallas_src>
import jax
import jax.numpy as jnp
from jax import lax
from jax.experimental import pallas as pl
from jax.experimental.pallas import tpu as pltpu


def rnn_classify_kernel(x_ref, wih_ref, whh_ref, b_ref, wout_ref, bout_ref,
                        out_ref, xp_ref):
    """x_ref:   (T, BB, D)  embedded tokens for this batch block (bf16, time-major)
       wih_ref: (D, D)      input->hidden weight, transposed for x @ W (bf16)
       whh_ref: (D, D)      hidden->hidden weight, transposed for h @ W (bf16)
       b_ref:   (1, D)      combined bias b_ih + b_hh (f32)
       wout_ref:(D, O_pad)  classifier weight, transposed + lane-padded (bf16)
       bout_ref:(1, O_pad)  classifier bias, lane-padded (f32)
       out_ref: (BB, O_pad) logits (f32, lane-dense)
       xp_ref:  (T, BB, D)  VMEM scratch holding the hoisted input projection (f32)
    """
    T, BB, D = x_ref.shape

    # (1) Hoisted input projection: one batched MXU matmul for all T steps + one
    #     bias broadcast, stored to scratch for dynamic per-step indexing.
    x_all = x_ref[...].reshape(T * BB, D)                                  # bf16
    xp = jnp.dot(x_all, wih_ref[...], preferred_element_type=jnp.float32)
    xp = xp + b_ref[...]
    xp_ref[...] = xp.reshape(T, BB, D)

    # (2) Serial recurrence: only h @ W_hh remains on the dependency chain.
    #     h is carried in vregs; W_hh is loaded once (1-vreg-scale tile).
    whh = whh_ref[...]                                                     # bf16

    def step(t, h):
        pre = xp_ref[t] + jnp.dot(h.astype(whh.dtype), whh,
                                  preferred_element_type=jnp.float32)
        return jnp.tanh(pre)

    h_final = lax.fori_loop(0, T, step, jnp.zeros((BB, D), jnp.float32),
                            unroll=True)

    # (3) Classifier on the final hidden state; lane-dense (O_pad=128) store.
    out_ref[...] = (jnp.dot(h_final.astype(wout_ref.dtype), wout_ref[...],
                            preferred_element_type=jnp.float32)
                    + bout_ref[...]).astype(out_ref.dtype)


def rnn_classify_forward(tokens, emb, w_ih_t, w_hh_t, bias, w_out_t, b_out,
                         *, batch_block=8):
    """tokens: (B, T) int32.  Returns logits (B, out_dim) float32."""
    B, T = tokens.shape
    D = emb.shape[1]
    O = w_out_t.shape[1]

    # Embedding lookup (glue, plain JAX gather).
    x_emb = jnp.take(emb, tokens, axis=0)                      # (B, T, D) f32

    # Pad batch to a sublane-aligned multiple of batch_block (padded rows are
    # computed independently and sliced away).
    B_pad = ((B + batch_block - 1) // batch_block) * batch_block
    if B_pad != B:
        x_emb = jnp.pad(x_emb, ((0, B_pad - B), (0, 0), (0, 0)))
    x_tbd = jnp.transpose(x_emb, (1, 0, 2)).astype(jnp.bfloat16)   # (T, B_pad, D)

    # bf16 MXU operands (f32 accumulation inside the kernel).
    wih = w_ih_t.astype(jnp.bfloat16)
    whh = w_hh_t.astype(jnp.bfloat16)

    # Lane-dense classifier output: pad O up to a multiple of 128 lanes.
    O_pad = ((O + 127) // 128) * 128
    wout = jnp.pad(w_out_t, ((0, 0), (0, O_pad - O))).astype(jnp.bfloat16)
    bout = jnp.pad(b_out, ((0, 0), (0, O_pad - O))).astype(jnp.float32)

    num_blocks = B_pad // batch_block
    BB = batch_block

    # TODO(synk): for large T / D, tile the time axis into the grid (or keep x in
    # HBM with memory_space=pl.ANY + double-buffered DMA) instead of one full
    # (T, B, D) VMEM block — needed for v7x's 64 MiB VMEM at realistic shapes.
    out = pl.pallas_call(
        rnn_classify_kernel,
        out_shape=jax.ShapeDtypeStruct((B_pad, O_pad), jnp.float32),
        grid=(num_blocks,),
        in_specs=[
            pl.BlockSpec((T, BB, D), lambda b: (0, b, 0)),
            pl.BlockSpec((D, D), lambda b: (0, 0)),
            pl.BlockSpec((D, D), lambda b: (0, 0)),
            pl.BlockSpec((1, D), lambda b: (0, 0)),
            pl.BlockSpec((D, O_pad), lambda b: (0, 0)),
            pl.BlockSpec((1, O_pad), lambda b: (0, 0)),
        ],
        out_specs=pl.BlockSpec((BB, O_pad), lambda b: (b, 0)),
        scratch_shapes=[pltpu.VMEM((T, BB, D), jnp.float32)],
        compiler_params=pltpu.CompilerParams(
            dimension_semantics=("parallel",)),
    )(x_tbd, wih, whh, bias, wout, bout)

    return out[:B, :O]


def reference_forward(tokens, emb, w_ih_t, w_hh_t, bias, w_out_t, b_out):
    """Pure-JAX f32 reference mirroring torch semantics (h_0 = 0, tanh)."""
    x_emb = jnp.take(emb, tokens, axis=0)                      # (B, T, D)
    B, T, D = x_emb.shape
    h = jnp.zeros((B, D), jnp.float32)
    for t in range(T):
        h = jnp.tanh(x_emb[:, t, :] @ w_ih_t + h @ w_hh_t + bias)
    return h @ w_out_t + b_out


if __name__ == "__main__":
    # Small shapes consistent with the module:
    vocab_size = 28      # e.g. a-z + pad + unk
    vocab_dim = 32       # embedding dim == RNN hidden size (module uses vocab_dim for both)
    out_dim = 8          # number of position classes
    batch = 16           # padded/split into two sublane-aligned blocks of 8
    seq_len = 8

    key = jax.random.PRNGKey(0)
    k_emb, k_wih, k_whh, k_bih, k_bhh, k_wout, k_bout, k_tok = jax.random.split(key, 8)

    bound = 1.0 / jnp.sqrt(vocab_dim)
    emb = jax.random.normal(k_emb, (vocab_size, vocab_dim), jnp.float32)
    # RNN / Linear weights stored transposed for x @ W form
    # (corresponds to PyTorch weight_ih_l0.T, weight_hh_l0.T, classify.weight.T).
    w_ih_t = jax.random.uniform(k_wih, (vocab_dim, vocab_dim), jnp.float32, -bound, bound)
    w_hh_t = jax.random.uniform(k_whh, (vocab_dim, vocab_dim), jnp.float32, -bound, bound)
    b_ih = jax.random.uniform(k_bih, (vocab_dim,), jnp.float32, -bound, bound)
    b_hh = jax.random.uniform(k_bhh, (vocab_dim,), jnp.float32, -bound, bound)
    bias = (b_ih + b_hh).reshape(1, vocab_dim)
    w_out_t = jax.random.uniform(k_wout, (vocab_dim, out_dim), jnp.float32, -bound, bound)
    b_out = jax.random.uniform(k_bout, (1, out_dim), jnp.float32, -bound, bound)

    tokens = jax.random.randint(k_tok, (batch, seq_len), 0, vocab_size, jnp.int32)

    logits = rnn_classify_forward(tokens, emb, w_ih_t, w_hh_t, bias, w_out_t, b_out)
    logits = jax.block_until_ready(logits)

    ref = reference_forward(tokens, emb, w_ih_t, w_hh_t, bias, w_out_t, b_out)
    assert logits.shape == (batch, out_dim)
    # Tolerance loosened vs. the f32 reference because MXU operands are bf16.
    assert jnp.allclose(logits, ref, atol=5e-2, rtol=5e-2)

    # TODO(synk): CrossEntropyLoss branch (y != None) not implemented; forward inference path only.
    print("KERNEL_OK")
</pallas_src>

<mosaic_0001>
module attributes {stable_mosaic.version = 11 : i64} {
  func.func @rnn_classify_kernel(%arg0: i32, %arg1: memref<8x8x32xbf16, #tpu.memory_space<vmem>>, %arg2: memref<32x32xbf16, #tpu.memory_space<vmem>>, %arg3: memref<32x32xbf16, #tpu.memory_space<vmem>>, %arg4: memref<1x32xf32, #tpu.memory_space<vmem>>, %arg5: memref<32x128xbf16, #tpu.memory_space<vmem>>, %arg6: memref<1x128xf32, #tpu.memory_space<vmem>>, %arg7: memref<8x128xf32, #tpu.memory_space<vmem>>, %arg8: memref<8x8x32xf32, #tpu.memory_space<vmem>>) attributes {dimension_semantics = [#tpu.dimension_semantics<parallel>], iteration_bounds = array<i64: 2>, scalar_prefetch = 0 : i64, scratch_operands = 1 : i64, tpu.core_type = #tpu.core_type<tc>, window_params = [{transform_indices = @transform_0, window_bounds = array<i64: 8, 8, 32>}, {pipeline_mode = #tpu.pipeline_mode<synchronous>, transform_indices = @transform_1, window_bounds = array<i64: 32, 32>}, {pipeline_mode = #tpu.pipeline_mode<synchronous>, transform_indices = @transform_2, window_bounds = array<i64: 32, 32>}, {pipeline_mode = #tpu.pipeline_mode<synchronous>, transform_indices = @transform_3, window_bounds = array<i64: 1, 32>}, {pipeline_mode = #tpu.pipeline_mode<synchronous>, transform_indices = @transform_4, window_bounds = array<i64: 32, 128>}, {pipeline_mode = #tpu.pipeline_mode<synchronous>, transform_indices = @transform_5, window_bounds = array<i64: 1, 128>}, {transform_indices = @transform_6, window_bounds = array<i64: 8, 128>}]} {
    %c0 = arith.constant 0 : index
    %c0_0 = arith.constant 0 : index
    %c0_1 = arith.constant 0 : index
    %0 = vector.load %arg1[%c0, %c0_0, %c0_1] : memref<8x8x32xbf16, #tpu.memory_space<vmem>>, vector<8x8x32xbf16>
    %1 = vector.shape_cast %0 : vector<8x8x32xbf16> to vector<64x32xbf16>
    %c0_2 = arith.constant 0 : index
    %c0_3 = arith.constant 0 : index
    %2 = vector.load %arg2[%c0_2, %c0_3] : memref<32x32xbf16, #tpu.memory_space<vmem>>, vector<32x32xbf16>
    %cst = arith.constant dense<0.000000e+00> : vector<64x32xf32>
    %3 = tpu.matmul %1, %2, %cst {dimension_numbers = #tpu.dot_dimension_numbers<[1], [0], [0], [1], [0, 0, 1, 1], [], []>} : vector<64x32xbf16>, vector<32x32xbf16>, vector<64x32xf32> -> vector<64x32xf32>
    %c0_4 = arith.constant 0 : index
    %c0_5 = arith.constant 0 : index
    %4 = vector.load %arg4[%c0_4, %c0_5] : memref<1x32xf32, #tpu.memory_space<vmem>>, vector<1x32xf32>
    %5 = vector.broadcast %4 : vector<1x32xf32> to vector<64x32xf32>
    %6 = arith.addf %3, %5 : vector<64x32xf32>
    %7 = vector.shape_cast %6 : vector<64x32xf32> to vector<8x8x32xf32>
    %c0_6 = arith.constant 0 : index
    %c0_7 = arith.constant 0 : index
    %c0_8 = arith.constant 0 : index
    %8 = vector.load %arg8[%c0_6, %c0_7, %c0_8] : memref<8x8x32xf32, #tpu.memory_space<vmem>>, vector<8x8x32xf32>
    tpu.vector_store %arg8[%c0_6, %c0_7, %c0_8], %7 {strides = array<i32>} : memref<8x8x32xf32, #tpu.memory_space<vmem>>, vector<8x8x32xf32>,
    %c0_9 = arith.constant 0 : index
    %c0_10 = arith.constant 0 : index
    %9 = vector.load %arg3[%c0_9, %c0_10] : memref<32x32xbf16, #tpu.memory_space<vmem>>, vector<32x32xbf16>
    %cst_11 = arith.constant 0.000000e+00 : f32
    %10 = vector.broadcast %cst_11 : f32 to vector<8x32xf32>
    %c0_i32 = arith.constant 0 : i32
    %11 = arith.index_cast %c0_i32 : i32 to index
    %c0_12 = arith.constant 0 : index
    %c0_13 = arith.constant 0 : index
    %12 = vector.load %arg8[%11, %c0_12, %c0_13] : memref<8x8x32xf32, #tpu.memory_space<vmem>>, vector<1x8x32xf32>
    %13 = vector.shape_cast %12 : vector<1x8x32xf32> to vector<8x32xf32>
    %14 = arith.truncf %10 : vector<8x32xf32> to vector<8x32xbf16>
    %cst_14 = arith.constant dense<0.000000e+00> : vector<8x32xf32>
    %15 = tpu.matmul %14, %9, %cst_14 {dimension_numbers = #tpu.dot_dimension_numbers<[1], [0], [0], [1], [0, 0, 1, 1], [], []>} : vector<8x32xbf16>, vector<32x32xbf16>, vector<8x32xf32> -> vector<8x32xf32>
    %16 = arith.addf %13, %15 : vector<8x32xf32>
    %17 = math.tanh %16 : vector<8x32xf32>
    %c1_i32 = arith.constant 1 : i32
    %18 = arith.index_cast %c1_i32 : i32 to index
    %c0_15 = arith.constant 0 : index
    %c0_16 = arith.constant 0 : index
    %19 = vector.load %arg8[%18, %c0_15, %c0_16] : memref<8x8x32xf32, #tpu.memory_space<vmem>>, vector<1x8x32xf32>
    %20 = vector.shape_cast %19 : vector<1x8x32xf32> to vector<8x32xf32>
    %21 = arith.truncf %17 : vector<8x32xf32> to vector<8x32xbf16>
    %cst_17 = arith.constant dense<0.000000e+00> : vector<8x32xf32>
    %22 = tpu.matmul %21, %9, %cst_17 {dimension_numbers = #tpu.dot_dimension_numbers<[1], [0], [0], [1], [0, 0, 1, 1], [], []>} : vector<8x32xbf16>, vector<32x32xbf16>, vector<8x32xf32> -> vector<8x32xf32>
    %23 = arith.addf %20, %22 : vector<8x32xf32>
    %24 = math.tanh %23 : vector<8x32xf32>
    %c2_i32 = arith.constant 2 : i32
    %25 = arith.index_cast %c2_i32 : i32 to index
    %c0_18 = arith.constant 0 : index
    %c0_19 = arith.constant 0 : index
    %26 = vector.load %arg8[%25, %c0_18, %c0_19] : memref<8x8x32xf32, #tpu.memory_space<vmem>>, vector<1x8x32xf32>
    %27 = vector.shape_cast %26 : vector<1x8x32xf32> to vector<8x32xf32>
    %28 = arith.truncf %24 : vector<8x32xf32> to vector<8x32xbf16>
    %cst_20 = arith.constant dense<0.000000e+00> : vector<8x32xf32>
    %29 = tpu.matmul %28, %9, %cst_20 {dimension_numbers = #tpu.dot_dimension_numbers<[1], [0], [0], [1], [0, 0, 1, 1], [], []>} : vector<8x32xbf16>, vector<32x32xbf16>, vector<8x32xf32> -> vector<8x32xf32>
    %30 = arith.addf %27, %29 : vector<8x32xf32>
    %31 = math.tanh %30 : vector<8x32xf32>
    %c3_i32 = arith.constant 3 : i32
    %32 = arith.index_cast %c3_i32 : i32 to index
    %c0_21 = arith.constant 0 : index
    %c0_22 = arith.constant 0 : index
    %33 = vector.load %arg8[%32, %c0_21, %c0_22] : memref<8x8x32xf32, #tpu.memory_space<vmem>>, vector<1x8x32xf32>
    %34 = vector.shape_cast %33 : vector<1x8x32xf32> to vector<8x32xf32>
    %35 = arith.truncf %31 : vector<8x32xf32> to vector<8x32xbf16>
    %cst_23 = arith.constant dense<0.000000e+00> : vector<8x32xf32>
    %36 = tpu.matmul %35, %9, %cst_23 {dimension_numbers = #tpu.dot_dimension_numbers<[1], [0], [0], [1], [0, 0, 1, 1], [], []>} : vector<8x32xbf16>, vector<32x32xbf16>, vector<8x32xf32> -> vector<8x32xf32>
    %37 = arith.addf %34, %36 : vector<8x32xf32>
    %38 = math.tanh %37 : vector<8x32xf32>
    %c4_i32 = arith.constant 4 : i32
    %39 = arith.index_cast %c4_i32 : i32 to index
    %c0_24 = arith.constant 0 : index
    %c0_25 = arith.constant 0 : index
    %40 = vector.load %arg8[%39, %c0_24, %c0_25] : memref<8x8x32xf32, #tpu.memory_space<vmem>>, vector<1x8x32xf32>
    %41 = vector.shape_cast %40 : vector<1x8x32xf32> to vector<8x32xf32>
    %42 = arith.truncf %38 : vector<8x32xf32> to vector<8x32xbf16>
    %cst_26 = arith.constant dense<0.000000e+00> : vector<8x32xf32>
    %43 = tpu.matmul %42, %9, %cst_26 {dimension_numbers = #tpu.dot_dimension_numbers<[1], [0], [0], [1], [0, 0, 1, 1], [], []>} : vector<8x32xbf16>, vector<32x32xbf16>, vector<8x32xf32> -> vector<8x32xf32>
    %44 = arith.addf %41, %43 : vector<8x32xf32>
    %45 = math.tanh %44 : vector<8x32xf32>
    %c5_i32 = arith.constant 5 : i32
    %46 = arith.index_cast %c5_i32 : i32 to index
    %c0_27 = arith.constant 0 : index
    %c0_28 = arith.constant 0 : index
    %47 = vector.load %arg8[%46, %c0_27, %c0_28] : memref<8x8x32xf32, #tpu.memory_space<vmem>>, vector<1x8x32xf32>
    %48 = vector.shape_cast %47 : vector<1x8x32xf32> to vector<8x32xf32>
    %49 = arith.truncf %45 : vector<8x32xf32> to vector<8x32xbf16>
    %cst_29 = arith.constant dense<0.000000e+00> : vector<8x32xf32>
    %50 = tpu.matmul %49, %9, %cst_29 {dimension_numbers = #tpu.dot_dimension_numbers<[1], [0], [0], [1], [0, 0, 1, 1], [], []>} : vector<8x32xbf16>, vector<32x32xbf16>, vector<8x32xf32> -> vector<8x32xf32>
    %51 = arith.addf %48, %50 : vector<8x32xf32>
    %52 = math.tanh %51 : vector<8x32xf32>
    %c6_i32 = arith.constant 6 : i32
    %53 = arith.index_cast %c6_i32 : i32 to index
    %c0_30 = arith.constant 0 : index
    %c0_31 = arith.constant 0 : index
    %54 = vector.load %arg8[%53, %c0_30, %c0_31] : memref<8x8x32xf32, #tpu.memory_space<vmem>>, vector<1x8x32xf32>
    %55 = vector.shape_cast %54 : vector<1x8x32xf32> to vector<8x32xf32>
    %56 = arith.truncf %52 : vector<8x32xf32> to vector<8x32xbf16>
    %cst_32 = arith.constant dense<0.000000e+00> : vector<8x32xf32>
    %57 = tpu.matmul %56, %9, %cst_32 {dimension_numbers = #tpu.dot_dimension_numbers<[1], [0], [0], [1], [0, 0, 1, 1], [], []>} : vector<8x32xbf16>, vector<32x32xbf16>, vector<8x32xf32> -> vector<8x32xf32>
    %58 = arith.addf %55, %57 : vector<8x32xf32>
    %59 = math.tanh %58 : vector<8x32xf32>
    %c7_i32 = arith.constant 7 : i32
    %60 = arith.index_cast %c7_i32 : i32 to index
    %c0_33 = arith.constant 0 : index
    %c0_34 = arith.constant 0 : index
    %61 = vector.load %arg8[%60, %c0_33, %c0_34] : memref<8x8x32xf32, #tpu.memory_space<vmem>>, vector<1x8x32xf32>
    %62 = vector.shape_cast %61 : vector<1x8x32xf32> to vector<8x32xf32>
    %63 = arith.truncf %59 : vector<8x32xf32> to vector<8x32xbf16>
    %cst_35 = arith.constant dense<0.000000e+00> : vector<8x32xf32>
    %64 = tpu.matmul %63, %9, %cst_35 {dimension_numbers = #tpu.dot_dimension_numbers<[1], [0], [0], [1], [0, 0, 1, 1], [], []>} : vector<8x32xbf16>, vector<32x32xbf16>, vector<8x32xf32> -> vector<8x32xf32>
    %65 = arith.addf %62, %64 : vector<8x32xf32>
    %66 = math.tanh %65 : vector<8x32xf32>
    %c8_i32 = arith.constant 8 : i32
    %67 = arith.truncf %66 : vector<8x32xf32> to vector<8x32xbf16>
    %c0_36 = arith.constant 0 : index
    %c0_37 = arith.constant 0 : index
    %68 = vector.load %arg5[%c0_36, %c0_37] : memref<32x128xbf16, #tpu.memory_space<vmem>>, vector<32x128xbf16>
    %cst_38 = arith.constant dense<0.000000e+00> : vector<8x128xf32>
    %69 = tpu.matmul %67, %68, %cst_38 {dimension_numbers = #tpu.dot_dimension_numbers<[1], [0], [0], [1], [0, 0, 1, 1], [], []>} : vector<8x32xbf16>, vector<32x128xbf16>, vector<8x128xf32> -> vector<8x128xf32>
    %c0_39 = arith.constant 0 : index
    %c0_40 = arith.constant 0 : index
    %70 = vector.load %arg6[%c0_39, %c0_40] : memref<1x128xf32, #tpu.memory_space<vmem>>, vector<1x128xf32>
    %71 = vector.broadcast %70 : vector<1x128xf32> to vector<8x128xf32>
    %72 = arith.addf %69, %71 : vector<8x128xf32>
    %c0_41 = arith.constant 0 : index
    %c0_42 = arith.constant 0 : index
    %73 = vector.load %arg7[%c0_41, %c0_42] : memref<8x128xf32, #tpu.memory_space<vmem>>, vector<8x128xf32>
    tpu.vector_store %arg7[%c0_41, %c0_42], %72 {strides = array<i32>} : memref<8x128xf32, #tpu.memory_space<vmem>>, vector<8x128xf32>,
    return
  }
  func.func @transform_0(%arg0: i32) -> (i32, i32, i32) {
    %c0_i32 = arith.constant 0 : i32
    %c0_i32_0 = arith.constant 0 : i32
    %c0_i32_1 = arith.constant 0 : i32
    return %c0_i32, %arg0, %c0_i32_0 : i32, i32, i32
  }
  func.func @transform_1(%arg0: i32) -> (i32, i32) {
    %c0_i32 = arith.constant 0 : i32
    %c0_i32_0 = arith.constant 0 : i32
    %c0_i32_1 = arith.constant 0 : i32
    return %c0_i32, %c0_i32_0 : i32, i32
  }
  func.func @transform_2(%arg0: i32) -> (i32, i32) {
    %c0_i32 = arith.constant 0 : i32
    %c0_i32_0 = arith.constant 0 : i32
    %c0_i32_1 = arith.constant 0 : i32
    return %c0_i32, %c0_i32_0 : i32, i32
  }
  func.func @transform_3(%arg0: i32) -> (i32, i32) {
    %c0_i32 = arith.constant 0 : i32
    %c0_i32_0 = arith.constant 0 : i32
    %c0_i32_1 = arith.constant 0 : i32
    return %c0_i32, %c0_i32_0 : i32, i32
  }
  func.func @transform_4(%arg0: i32) -> (i32, i32) {
    %c0_i32 = arith.constant 0 : i32
    %c0_i32_0 = arith.constant 0 : i32
    %c0_i32_1 = arith.constant 0 : i32
    return %c0_i32, %c0_i32_0 : i32, i32
  }
  func.func @transform_5(%arg0: i32) -> (i32, i32) {
    %c0_i32 = arith.constant 0 : i32
    %c0_i32_0 = arith.constant 0 : i32
    %c0_i32_1 = arith.constant 0 : i32
    return %c0_i32, %c0_i32_0 : i32, i32
  }
  func.func @transform_6(%arg0: i32) -> (i32, i32) {
    %c0_i32 = arith.constant 0 : i32
    %c0_i32_0 = arith.constant 0 : i32
    return %arg0, %c0_i32 : i32, i32
  }
}

</mosaic_0001>

<llo_original>
// kernel: tpu_custom_call.1
$region0: #{tpu_custom_call.1}
  #allocation0 [shape = 'u32[]', space=smem, size = 0x4, offset = 0x4, fixed_abs, tag = 'smem constant byte address 0x4 - core index']
  #allocation1 [shape = 'u32[144,128]{1,0:T(1,128)}', space=vmem, size = 0x12000, scoped, tag = 'internal scratch']
  #allocation2 [shape = 'f32[8,8,32]{2,1,0:T(8,128)}', space=vmem, size = 0x8000, scoped, tag = 'scratch operand']
  %s0 = inlined_call_operand.hbm [shape: bf16[8,16,32], index: 0, kind: input, shape index: {}]
  %s1 = inlined_call_operand.hbm [shape: bf16[32,32], index: 1, kind: input, shape index: {}]
  %s2 = inlined_call_operand.hbm [shape: bf16[32,32], index: 2, kind: input, shape index: {}]
  %s3 = inlined_call_operand.vmem [shape: f32[1,32], index: 3, kind: input, shape index: {}]
  %s4 = inlined_call_operand.hbm [shape: bf16[32,128], index: 4, kind: input, shape index: {}]
  %s5 = inlined_call_operand.vmem [shape: f32[1,128], index: 5, kind: input, shape index: {}]
  %s6 = inlined_call_operand.hbm [shape: f32[16,128], index: 6, kind: output, shape index: {}]
  %s7 = sld [smem:[#allocation0]]
  $region73: #{tpu_custom_call.1} parent=0
    _
  %s9 = ssub.s32 1, %s7
  %s10 = scalar_select 0, %s9, %s7
  $region1: #{tpu_custom_call.1} parent=0
    #allocation3 [shape = 'u8[32768]{0}', space=vmem, size = 0x8000, scoped, tag = 'input window, operand 0']
    #allocation4 [shape = 's32[2]{0}', space=sflag, size = 0x8, scoped, tag = 'scoped memory for tpu_custom_call.1']
    #allocation5 [shape = 's32[2]{0}', space=sflag, size = 0x8, scoped, tag = 'scoped memory for tpu_custom_call.1']
    #allocation6 [shape = 'u8[8192]{0}', space=vmem, size = 0x2000, scoped, tag = 'input window, operand 1, single buffered']
    #allocation7 [shape = 's32[1]{0}', space=sflag, size = 0x4, scoped, tag = 'scoped memory for tpu_custom_call.1']
    #allocation8 [shape = 'u8[8192]{0}', space=vmem, size = 0x2000, scoped, tag = 'input window, operand 2, single buffered']
    #allocation9 [shape = 'u8[8192]{0}', space=vmem, size = 0x2000, scoped, tag = 'input window, operand 4, single buffered']
    #allocation10 [shape = 's32[1]{0}', space=sflag, size = 0x4, scoped, tag = 'scoped memory for tpu_custom_call.1']
    #allocation11 [shape = 'u8[8192]{0}', space=vmem, size = 0x2000, scoped, tag = 'output window, operand 0']
    %11 = vsyncpa [#allocation4], 0
    %s12 = scalar_lea.sflag [#allocation4], 1
    %13 = vsyncpa %s12, 0
    %14 = vsyncpa [#allocation7], 0
    %15 = vsyncpa [#allocation10], 0
    %16 = vsyncpa [#allocation5], 0
    %s17 = scalar_lea.sflag [#allocation5], 1
    %18 = vsyncpa %s17, 0
    loop: start=0, step=1, limit=4
    $region2: #{tpu_custom_call.1} parent=1 // loop_pre_header
      _
    $region3: #{tpu_custom_call.1} parent=1 // loop_header
      %s20 = sphi 0, %s24
      %p21 = scmp.ge.s32.totalorder %s20, 4
      %s30 = sphi 0, %s32
      %s33 = sphi 0, %s30
      %s34 = sphi 0, %s33
      %s50 = sphi 0, %s34
      %s54 = sphi 0, %s54
      %s56 = sphi 0, %s54
      %s57 = sphi 0, %s56
      %s71 = sphi 0, %s57
      %s75 = sphi 0, %s75
      %s77 = sphi 0, %s75
      %s78 = sphi 0, %s77
      %s92 = sphi 0, %s78
      %s96 = sphi 0, %s96
      %s98 = sphi 0, %s96
      %s99 = sphi 0, %s98
      %s113 = sphi 0, %s99
      %s117 = sphi 0, %s117
      %s119 = sphi 0, %s117
      %s120 = sphi 0, %s119
      %s134 = sphi 0, %s120
      %s138 = sphi 0, %s138
      %s140 = sphi 0, %s138
      %s141 = sphi 0, %s140
      %s155 = sphi 0, %s141
      %s161 = sphi 0, %s163
      %s164 = sphi 0, %s161
      %s165 = sphi 0, %s164
      %s181 = sphi 0, %s165
    $region4: #{tpu_custom_call.1} parent=1 // loop_header_branch
      %23 = sbr.rel (%p21) target = $region8
    $region5: #{tpu_custom_call.1} parent=1 // loop_body
      %s25 = ssub.s32 %s20, 1
      %s26 = ssub.s32 %s20, 2
      %s27 = sadd.s32 %s20, 1
      %s28 = ssub.s32 %s20, %s27
      %p29 = scmp.eq.s32.totalorder %s28, 0
      %s31 = sadd.s32 %s30, 1
      %s32 = scalar_select %p29, %s30, %s31
      %p35 = pneg %p29
      %p36 = scmp.eq.s32.totalorder %s20, 1
      %p37 = por %p35, %p36
      %p38 = scmp.ne.s32.totalorder %s30, %s33
      %p39 = scmp.eq.s32.totalorder %s20, 0
      %p40 = por %p38, %p39
      %p41 = scmp.ne.s32.totalorder %s30, %s33
      %p42 = scmp.eq.s32.totalorder %s25, 1
      %p43 = por %p41, %p42
      %p44 = scmp.ne.s32.totalorder %s33, %s34
      %p45 = scmp.eq.s32.totalorder %s25, 0
      %p46 = por %p44, %p45
      %p47 = scmp.ne.s32.totalorder %s33, %s34
      %p48 = scmp.eq.s32.totalorder %s26, 1
      %p49 = por %p47, %p48
      %p51 = scmp.ne.s32.totalorder %s34, %s50
      %p52 = scmp.eq.s32.totalorder %s26, 0
      %p53 = por %p51, %p52
      %s55 = sadd.s32 %s54, 1
      %p58 = scmp.eq.s32.totalorder %s20, 1
      %p59 = scmp.ne.s32.totalorder %s54, %s56
      %p60 = scmp.eq.s32.totalorder %s20, 0
      %p61 = por %p59, %p60
      %p62 = scmp.ne.s32.totalorder %s54, %s56
      %p63 = scmp.eq.s32.totalorder %s25, 1
      %p64 = por %p62, %p63
      %p65 = scmp.ne.s32.totalorder %s56, %s57
      %p66 = scmp.eq.s32.totalorder %s25, 0
      %p67 = por %p65, %p66
      %p68 = scmp.ne.s32.totalorder %s56, %s57
      %p69 = scmp.eq.s32.totalorder %s26, 1
      %p70 = por %p68, %p69
      %p72 = scmp.ne.s32.totalorder %s57, %s71
      %p73 = scmp.eq.s32.totalorder %s26, 0
      %p74 = por %p72, %p73
      %s76 = sadd.s32 %s75, 1
      %p79 = scmp.eq.s32.totalorder %s20, 1
      %p80 = scmp.ne.s32.totalorder %s75, %s77
      %p81 = scmp.eq.s32.totalorder %s20, 0
      %p82 = por %p80, %p81
      %p83 = scmp.ne.s32.totalorder %s75, %s77
      %p84 = scmp.eq.s32.totalorder %s25, 1
      %p85 = por %p83, %p84
      %p86 = scmp.ne.s32.totalorder %s77, %s78
      %p87 = scmp.eq.s32.totalorder %s25, 0
      %p88 = por %p86, %p87
      %p89 = scmp.ne.s32.totalorder %s77, %s78
      %p90 = scmp.eq.s32.totalorder %s26, 1
      %p91 = por %p89, %p90
      %p93 = scmp.ne.s32.totalorder %s78, %s92
      %p94 = scmp.eq.s32.totalorder %s26, 0
      %p95 = por %p93, %p94
      %s97 = sadd.s32 %s96, 1
      %p100 = scmp.eq.s32.totalorder %s20, 1
      %p101 = scmp.ne.s32.totalorder %s96, %s98
      %p102 = scmp.eq.s32.totalorder %s20, 0
      %p103 = por %p101, %p102
      %p104 = scmp.ne.s32.totalorder %s96, %s98
      %p105 = scmp.eq.s32.totalorder %s25, 1
      %p106 = por %p104, %p105
      %p107 = scmp.ne.s32.totalorder %s98, %s99
      %p108 = scmp.eq.s32.totalorder %s25, 0
      %p109 = por %p107, %p108
      %p110 = scmp.ne.s32.totalorder %s98, %s99
      %p111 = scmp.eq.s32.totalorder %s26, 1
      %p112 = por %p110, %p111
      %p114 = scmp.ne.s32.totalorder %s99, %s113
      %p115 = scmp.eq.s32.totalorder %s26, 0
      %p116 = por %p114, %p115
      %s118 = sadd.s32 %s117, 1
      %p121 = scmp.eq.s32.totalorder %s20, 1
      %p122 = scmp.ne.s32.totalorder %s117, %s119
      %p123 = scmp.eq.s32.totalorder %s20, 0
      %p124 = por %p122, %p123
      %p125 = scmp.ne.s32.totalorder %s117, %s119
      %p126 = scmp.eq.s32.totalorder %s25, 1
      %p127 = por %p125, %p126
      %p128 = scmp.ne.s32.totalorder %s119, %s120
      %p129 = scmp.eq.s32.totalorder %s25, 0
      %p130 = por %p128, %p129
      %p131 = scmp.ne.s32.totalorder %s119, %s120
      %p132 = scmp.eq.s32.totalorder %s26, 1
      %p133 = por %p131, %p132
      %p135 = scmp.ne.s32.totalorder %s120, %s134
      %p136 = scmp.eq.s32.totalorder %s26, 0
      %p137 = por %p135, %p136
      %s139 = sadd.s32 %s138, 1
      %p142 = scmp.eq.s32.totalorder %s20, 1
      %p143 = scmp.ne.s32.totalorder %s138, %s140
      %p144 = scmp.eq.s32.totalorder %s20, 0
      %p145 = por %p143, %p144
      %p146 = scmp.ne.s32.totalorder %s138, %s140
      %p147 = scmp.eq.s32.totalorder %s25, 1
      %p148 = por %p146, %p147
      %p149 = scmp.ne.s32.totalorder %s140, %s141
      %p150 = scmp.eq.s32.totalorder %s25, 0
      %p151 = por %p149, %p150
      %p152 = scmp.ne.s32.totalorder %s140, %s141
      %p153 = scmp.eq.s32.totalorder %s26, 1
      %p154 = por %p152, %p153
      %p156 = scmp.ne.s32.totalorder %s141, %s155
      %p157 = scmp.eq.s32.totalorder %s26, 0
      %p158 = por %p156, %p157
      %s159 = ssub.s32 %s20, %s27
      %p160 = scmp.eq.s32.totalorder %s159, 0
      %s162 = sadd.s32 %s161, 1
      %s163 = scalar_select %p160, %s161, %s162
      %p166 = pneg %p160
      %p167 = scmp.eq.s32.totalorder %s20, 1
      %p168 = por %p166, %p167
      %p169 = scmp.ne.s32.totalorder %s161, %s164
      %p170 = scmp.eq.s32.totalorder %s20, 0
      %p171 = por %p169, %p170
      %p172 = scmp.ne.s32.totalorder %s161, %s164
      %p173 = scmp.eq.s32.totalorder %s25, 1
      %p174 = por %p172, %p173
      %p175 = scmp.ne.s32.totalorder %s164, %s165
      %p176 = scmp.eq.s32.totalorder %s25, 0
      %p177 = por %p175, %p176
      %p178 = scmp.ne.s32.totalorder %s164, %s165
      %p179 = scmp.eq.s32.totalorder %s26, 1
      %p180 = por %p178, %p179
      %p182 = scmp.ne.s32.totalorder %s165, %s181
      %p183 = scmp.eq.s32.totalorder %s26, 0
      %p184 = por %p182, %p183
      %p185 = scmp.le.s32.totalorder 1, %s20
      %p186 = scmp.lt.s32.totalorder %s20, 3
      %p187 = pnand %p185, %p186
      %p188 = pneg %p187
      // Predicated region
      $region9: #{tpu_custom_call.1} parent=5 // pred_check
        _
      $region10: #{tpu_custom_call.1} parent=5 // pred_check_branch
        %190 = sbr.rel (%p187) target = $region12
      $region11: #{tpu_custom_call.1} parent=5 // pred_region
        %s191 = ssub.s32 %s20, 1
        // Predicated region
        $region13: #{tpu_custom_call.1} parent=11 // pred_check
          %p192 = pneg %p67
        $region14: #{tpu_custom_call.1} parent=11 // pred_check_branch
          %194 = sbr.rel (%p192) target = $region16
        $region15: #{tpu_custom_call.1} parent=11 // pred_region
          %s196 = ssub.s32 256, 256
          %197 = vsyncadd [#allocation7], %s196
          %s198 = sshll.u32 [#allocation6], 4
          %s199 = int_to_ptr.vmem [resolvable:$true] %s198
          %204 = dma.hbm_to_vmem [thread:$0]  %s1, 256, %s199, [#allocation7], 64, 64, 4
        $region16: #{tpu_custom_call.1} parent=11 // pred_fallthru
          _
        // Predicated region
        $region17: #{tpu_custom_call.1} parent=11 // pred_check
          %p205 = pneg %p88
        $region18: #{tpu_custom_call.1} parent=11 // pred_check_branch
          %207 = sbr.rel (%p205) target = $region20
        $region19: #{tpu_custom_call.1} parent=11 // pred_region
          %s209 = ssub.s32 256, 256
          %210 = vsyncadd [#allocation7], %s209
          %s211 = sshll.u32 [#allocation8], 4
          %s212 = int_to_ptr.vmem [resolvable:$true] %s211
          %217 = dma.hbm_to_vmem [thread:$0]  %s2, 256, %s212, [#allocation7], 64, 64, 4
        $region20: #{tpu_custom_call.1} parent=11 // pred_fallthru
          _
        // Predicated region
        $region21: #{tpu_custom_call.1} parent=11 // pred_check
          %p218 = pneg %p109
        $region22: #{tpu_custom_call.1} parent=11 // pred_check_branch
          %220 = sbr.rel (%p218) target = $region24
        $region23: #{tpu_custom_call.1} parent=11 // pred_region
          _
        $region24: #{tpu_custom_call.1} parent=11 // pred_fallthru
          _
        // Predicated region
        $region25: #{tpu_custom_call.1} parent=11 // pred_check
          %p221 = pneg %p130
        $region26: #{tpu_custom_call.1} parent=11 // pred_check_branch
          %223 = sbr.rel (%p221) target = $region28
        $region27: #{tpu_custom_call.1} parent=11 // pred_region
          %s225 = ssub.s32 256, 256
          %226 = vsyncadd [#allocation10], %s225
          %s227 = sshll.u32 [#allocation9], 4
          %s228 = int_to_ptr.vmem [resolvable:$true] %s227
          %233 = dma.hbm_to_vmem [thread:$0]  %s4, 256, %s228, [#allocation10], 64, 64, 4
        $region28: #{tpu_custom_call.1} parent=11 // pred_fallthru
          _
        // Predicated region
        $region29: #{tpu_custom_call.1} parent=11 // pred_check
          %p234 = pneg %p151
        $region30: #{tpu_custom_call.1} parent=11 // pred_check_branch
          %236 = sbr.rel (%p234) target = $region32
        $region31: #{tpu_custom_call.1} parent=11 // pred_region
          _
        $region32: #{tpu_custom_call.1} parent=11 // pred_fallthru
          _
      $region12: #{tpu_custom_call.1} parent=5 // pred_fallthru
        _
      %p237 = scmp.lt.s32.totalorder %s20, 2
      // Predicated region
      $region33: #{tpu_custom_call.1} parent=5 // pred_check
        %p238 = pneg %p237
      $region34: #{tpu_custom_call.1} parent=5 // pred_check_branch
        %240 = sbr.rel (%p238) target = $region36
      $region35: #{tpu_custom_call.1} parent=5 // pred_region
        // Predicated region
        $region37: #{tpu_custom_call.1} parent=35 // pred_check
          %p241 = pneg %p40
        $region38: #{tpu_custom_call.1} parent=35 // pred_check_branch
          %243 = sbr.rel (%p241) target = $region40
        $region39: #{tpu_custom_call.1} parent=35 // pred_region
          %s244 = sand.u32 %s30, 1
          %s245 = scalar_lea.sflag [#allocation4], %s244
          %s246 = sand.u32 %s30, 1
          %s247 = smul.addr %s246, 32
          %s248 = scalar_lea.vmem [#allocation3], %s247
          %s250 = ssub.s32 512, 512
          %251 = vsyncadd %s245, %s250
          %s252 = smul.addr %s20, 64
          %s253 = scalar_lea.hbm %s0, %s252
          %s254 = sshll.u32 %s248, 4
          %s255 = int_to_ptr.vmem [resolvable:$true] %s254
          %260 = dma.hbm_to_vmem [thread:$0]  %s253, 512, %s255, %s245, 128, 64, 4
        $region40: #{tpu_custom_call.1} parent=35 // pred_fallthru
          _
      $region36: #{tpu_custom_call.1} parent=5 // pred_fallthru
        _
      %p261 = scmp.le.s32.totalorder 1, %s20
      %p262 = scmp.lt.s32.totalorder %s20, 3
      %p263 = pnand %p261, %p262
      %p264 = pneg %p263
      // Predicated region
      $region41: #{tpu_custom_call.1} parent=5 // pred_check
        _
      $region42: #{tpu_custom_call.1} parent=5 // pred_check_branch
        %266 = sbr.rel (%p263) target = $region44
      $region43: #{tpu_custom_call.1} parent=5 // pred_region
        %s267 = ssub.s32 %s20, 1
        %s268 = sand.u32 %s33, 1
        %s269 = scalar_lea.sflag [#allocation4], %s268
        %s270 = sand.u32 %s33, 1
        %s271 = smul.addr %s270, 32
        %s272 = scalar_lea.vmem [#allocation3], %s271
        // Predicated region
        $region45: #{tpu_custom_call.1} parent=43 // pred_check
          %p273 = pneg %p46
        $region46: #{tpu_custom_call.1} parent=43 // pred_check_branch
          %275 = sbr.rel (%p273) target = $region48
        $region47: #{tpu_custom_call.1} parent=43 // pred_region
          %276 = dma.done %s269, 512
        $region48: #{tpu_custom_call.1} parent=43 // pred_fallthru
          _
        // Predicated region
        $region49: #{tpu_custom_call.1} parent=43 // pred_check
          %p277 = pneg %p67
        $region50: #{tpu_custom_call.1} parent=43 // pred_check_branch
          %279 = sbr.rel (%p277) target = $region52
        $region51: #{tpu_custom_call.1} parent=43 // pred_region
          %280 = dma.done [#allocation7], 256
        $region52: #{tpu_custom_call.1} parent=43 // pred_fallthru
          _
        // Predicated region
        $region53: #{tpu_custom_call.1} parent=43 // pred_check
          %p281 = pneg %p88
        $region54: #{tpu_custom_call.1} parent=43 // pred_check_branch
          %283 = sbr.rel (%p281) target = $region56
        $region55: #{tpu_custom_call.1} parent=43 // pred_region
          %284 = dma.done [#allocation7], 256
        $region56: #{tpu_custom_call.1} parent=43 // pred_fallthru
          _
        // Predicated region
        $region57: #{tpu_custom_call.1} parent=43 // pred_check
          %p285 = pneg %p130
        $region58: #{tpu_custom_call.1} parent=43 // pred_check_branch
          %287 = sbr.rel (%p285) target = $region60
        $region59: #{tpu_custom_call.1} parent=43 // pred_region
          %288 = dma.done [#allocation10], 256
        $region60: #{tpu_custom_call.1} parent=43 // pred_fallthru
          _
        %s289 = sand.u32 %s33, 1
        %s290 = scalar_lea.sflag [#allocation4], %s289
        %s291 = sand.u32 %s33, 1
        %s292 = smul.addr %s291, 32
        %s293 = scalar_lea.vmem [#allocation3], %s292
        %p294 = pneg %p46
        %p295 = pneg %p43
        %p296 = pneg %p67
        %p297 = pneg %p64
        %p298 = pneg %p88
        %p299 = pneg %p85
        %p300 = pneg %p109
        %p301 = pneg %p106
        %p302 = pneg %p130
        %p303 = pneg %p127
        %p304 = pneg %p151
        %p305 = pneg %p148
        %p306 = pneg %p177
        %p307 = pneg %p174
        %s308 = sand.u32 %s164, 1
        %s309 = scalar_lea.sflag [#allocation5], %s308
        %s310 = sand.u32 %s164, 1
        %s311 = smul.addr %s310, 8
        %s312 = scalar_lea.vmem [#allocation11], %s311
        %v314 = vld [vmem:[%s272] sm:$0xf]
        %v315 = vld [vmem:[%s272 + $0x4] sm:$0xf]
        %v316 = vld [vmem:[%s272 + $0x8] sm:$0xf]
        %v317 = vld [vmem:[%s272 + $0xc] sm:$0xf]
        %v318 = vld [vmem:[%s272 + $0x10] sm:$0xf]
        %v319 = vld [vmem:[%s272 + $0x14] sm:$0xf]
        %v320 = vld [vmem:[%s272 + $0x18] sm:$0xf]
        %v321 = vld [vmem:[%s272 + $0x1c] sm:$0xf]
        %v322 = vld [vmem:[#allocation6] sm:$0xf]
        %v323 = vld [vmem:[#allocation6 + $0x4] sm:$0xf]
        %v324 = vld [vmem:[#allocation6 + $0x8] sm:$0xf]
        %v325 = vld [vmem:[#allocation6 + $0xc] sm:$0xf]
        %v326 = vld [vmem:[%s3] sm:$0x1]
        %v328 = vlaneseq
        %v329 = vshrl.u32 %v328, 7
        %v330 = vsub.s32 0, %v329
        %v331 = vrot.slane %v326, %v330
        %v341 = vunpack.c.l.b16 %v314
        %v342 = vunpack.c.l.b16 %v315
        %v343 = vunpack.c.l.b16 %v316
        %v344 = vunpack.c.l.b16 %v317
        %v345 = vunpack.c.l.b16 %v318
        %v346 = vunpack.c.l.b16 %v319
        %v347 = vunpack.c.l.b16 %v320
        %v348 = vunpack.c.l.b16 %v321
        %v349 = vpack.c.b16 %v342, %v341
        %v350 = vpack.c.b16 %v344, %v343
        %v351 = vpack.c.b16 %v346, %v345
        %v352 = vpack.c.b16 %v348, %v347
        %v357 = vunpack.c.l.b16 %v322
        %v358 = vunpack.c.l.b16 %v323
        %v359 = vunpack.c.l.b16 %v324
        %v360 = vunpack.c.l.b16 %v325
        %v361 = vpack.c.b16 %v358, %v357
        %v362 = vpack.c.b16 %v360, %v359
        %vm365 = vcmask 261120
        %v367 = vsel %vm365, %v349, 0
        %v370 = vsel %vm365, %v350, 0
        %v373 = vsel %vm365, %v351, 0
        %v376 = vsel %vm365, %v352, 0
        %378 = vmatprep.subr.bf16.mxu0 0
        %379 = vmatpush1.bf16.msra.mxu0 %v361
        %380 = vmatprep.subr.bf16.mxu0 0
        %381 = vmatpush1.bf16.msra.mxu0 %v362
        %382 = vmatprep.subr.bf16.mxu0 0
        %383 = vmatpush1.bf16.msra.mxu0 0
        %384 = vmatprep.subr.bf16.mxu0 0
        %385 = vmatpush1.bf16.msra.mxu0 0
        %386 = vmatprep.subr.bf16.mxu0 0
        %387 = vmatpush1.bf16.msra.mxu0 0
        %388 = vmatprep.subr.bf16.mxu0 0
        %389 = vmatpush1.bf16.msra.mxu0 0
        %390 = vmatprep.subr.bf16.mxu0 0
        %391 = vmatpush1.bf16.msra.mxu0 0
        %392 = vmatprep.subr.bf16.mxu0 0
        %393 = vmatpush1.bf16.msra.mxu0 0
        %394 = vmatprep.subr.bf16.mxu0 0
        %395 = vmatpush1.bf16.msra.mxu0 0
        %396 = vmatprep.subr.bf16.mxu0 0
        %397 = vmatpush1.bf16.msra.mxu0 0
        %398 = vmatprep.subr.bf16.mxu0 0
        %399 = vmatpush1.bf16.msra.mxu0 0
        %400 = vmatprep.subr.bf16.mxu0 0
        %401 = vmatpush1.bf16.msra.mxu0 0
        %402 = vmatprep.subr.bf16.mxu0 0
        %403 = vmatpush1.bf16.msra.mxu0 0
        %404 = vmatprep.subr.bf16.mxu0 0
        %405 = vmatpush1.bf16.msra.mxu0 0
        %406 = vmatprep.subr.bf16.mxu0 0
        %407 = vmatpush1.bf16.msra.mxu0 0
        %408 = vmatprep.subr.bf16.mxu0 0
        %409 = vmatpush1.bf16.msra.mxu0 0
        %410 = vmatprep.mubr.bf16.mxu0 0
        %411 = vmatmul.mubr.bf16.gmra.mrb[0].mxu0 %v367
        %v412 = vpop.f32.mrb[0].mxu0
        %v413 = vadd.f32 %v331, %v412
        %v414 = vpop.f32.mrb[0].mxu0
        %v415 = vpop.f32.mrb[0].mxu0
        %v416 = vadd.f32 %v331, %v415
        %v417 = vpop.f32.mrb[0].mxu0
        %418 = vmatprep.mubr.bf16.mxu0 0
        %419 = vmatmul.mubr.bf16.gmra.mrb[0].mxu0 %v370
        %v420 = vpop.f32.mrb[0].mxu0
        %v421 = vadd.f32 %v331, %v420
        %v422 = vpop.f32.mrb[0].mxu0
        %v423 = vpop.f32.mrb[0].mxu0
        %v424 = vadd.f32 %v331, %v423
        %v425 = vpop.f32.mrb[0].mxu0
        %426 = vmatprep.mubr.bf16.mxu0 0
        %427 = vmatmul.mubr.bf16.gmra.mrb[0].mxu0 %v373
        %v428 = vpop.f32.mrb[0].mxu0
        %v429 = vadd.f32 %v331, %v428
        %v430 = vpop.f32.mrb[0].mxu0
        %v431 = vpop.f32.mrb[0].mxu0
        %v432 = vadd.f32 %v331, %v431
        %v433 = vpop.f32.mrb[0].mxu0
        %434 = vmatprep.mubr.bf16.mxu0 0
        %435 = vmatmul.mubr.bf16.gmra.mrb[0].mxu0 %v376
        %v436 = vpop.f32.mrb[0].mxu0
        %v437 = vadd.f32 %v331, %v436
        %v438 = vpop.f32.mrb[0].mxu0
        %v439 = vpop.f32.mrb[0].mxu0
        %v440 = vadd.f32 %v331, %v439
        %v441 = vpop.f32.mrb[0].mxu0
        %442 = vdwg.mxu0
        %443 = vst.msk [vmem:[#allocation2] sm:$0xff] %vm365, %v413
        %444 = vst.msk [vmem:[#allocation2 + $0x8] sm:$0xff] %vm365, %v416
        %445 = vst.msk [vmem:[#allocation2 + $0x10] sm:$0xff] %vm365, %v421
        %446 = vst.msk [vmem:[#allocation2 + $0x18] sm:$0xff] %vm365, %v424
        %447 = vst.msk [vmem:[#allocation2 + $0x20] sm:$0xff] %vm365, %v429
        %448 = vst.msk [vmem:[#allocation2 + $0x28] sm:$0xff] %vm365, %v432
        %449 = vst.msk [vmem:[#allocation2 + $0x30] sm:$0xff] %vm365, %v437
        %450 = vst.msk [vmem:[#allocation2 + $0x38] sm:$0xff] %vm365, %v440
        %v451 = vld [vmem:[#allocation8] sm:$0xf]
        %v452 = vld [vmem:[#allocation8 + $0x4] sm:$0xf]
        %v453 = vld [vmem:[#allocation8 + $0x8] sm:$0xf]
        %v454 = vld [vmem:[#allocation8 + $0xc] sm:$0xf]
        %v455 = vld [vmem:[#allocation2] sm:$0xff]
        %v460 = vunpack.c.l.b16 %v451
        %v461 = vunpack.c.l.b16 %v452
        %v462 = vunpack.c.l.b16 %v453
        %v463 = vunpack.c.l.b16 %v454
        %v464 = vpack.c.b16 %v461, %v460
        %v465 = vpack.c.b16 %v463, %v462
        %v469 = vsel %vm365, 0, 0
        %471 = vmatprep.subr.bf16.mxu0 0
        %472 = vmatpush1.bf16.msra.mxu0 %v464
        %473 = vmatprep.subr.bf16.mxu0 0
        %474 = vmatpush1.bf16.msra.mxu0 %v465
        %475 = vmatprep.subr.bf16.mxu0 0
        %476 = vmatpush1.bf16.msra.mxu0 0
        %477 = vmatprep.subr.bf16.mxu0 0
        %478 = vmatpush1.bf16.msra.mxu0 0
        %479 = vmatprep.subr.bf16.mxu0 0
        %480 = vmatpush1.bf16.msra.mxu0 0
        %481 = vmatprep.subr.bf16.mxu0 0
        %482 = vmatpush1.bf16.msra.mxu0 0
        %483 = vmatprep.subr.bf16.mxu0 0
        %484 = vmatpush1.bf16.msra.mxu0 0
        %485 = vmatprep.subr.bf16.mxu0 0
        %486 = vmatpush1.bf16.msra.mxu0 0
        %487 = vmatprep.subr.bf16.mxu0 0
        %488 = vmatpush1.bf16.msra.mxu0 0
        %489 = vmatprep.subr.bf16.mxu0 0
        %490 = vmatpush1.bf16.msra.mxu0 0
        %491 = vmatprep.subr.bf16.mxu0 0
        %492 = vmatpush1.bf16.msra.mxu0 0
        %493 = vmatprep.subr.bf16.mxu0 0
        %494 = vmatpush1.bf16.msra.mxu0 0
        %495 = vmatprep.subr.bf16.mxu0 0
        %496 = vmatpush1.bf16.msra.mxu0 0
        %497 = vmatprep.subr.bf16.mxu0 0
        %498 = vmatpush1.bf16.msra.mxu0 0
        %499 = vmatprep.subr.bf16.mxu0 0
        %500 = vmatpush1.bf16.msra.mxu0 0
        %501 = vmatprep.subr.bf16.mxu0 0
        %502 = vmatpush1.bf16.msra.mxu0 0
        %503 = vmatprep.mubr.bf16.mxu0 0
        %504 = vmatmul.mubr.bf16.gmra.mrb[0].mxu0 %v469
        %v505 = vpop.f32.mrb[0].mxu0
        %v506 = vadd.f32 0.0, %v505
        %v507 = vpop.f32.mrb[0].mxu0
        %v508 = vpop.f32.mrb[0].mxu0
        %v509 = vpop.f32.mrb[0].mxu0
        %510 = vdwg.mxu0
        %v511 = vadd.f32 %v455, %v506
        %v512 = vtanh.pop %v511
        %s513 = scalar_lea.vmem [#allocation2], 8
        %v514 = vld [vmem:[%s513] sm:$0xff]
        %v515 = vpack.c.bf16 %v512, %v512
        %v517 = vsel %vm365, %v515, 0
        %519 = vmatprep.subr.bf16.mxu0 0
        %520 = vmatpush1.bf16.msra.mxu0 %v464
        %521 = vmatprep.subr.bf16.mxu0 0
        %522 = vmatpush1.bf16.msra.mxu0 %v465
        %523 = vmatprep.subr.bf16.mxu0 0
        %524 = vmatpush1.bf16.msra.mxu0 0
        %525 = vmatprep.subr.bf16.mxu0 0
        %526 = vmatpush1.bf16.msra.mxu0 0
        %527 = vmatprep.subr.bf16.mxu0 0
        %528 = vmatpush1.bf16.msra.mxu0 0
        %529 = vmatprep.subr.bf16.mxu0 0
        %530 = vmatpush1.bf16.msra.mxu0 0
        %531 = vmatprep.subr.bf16.mxu0 0
        %532 = vmatpush1.bf16.msra.mxu0 0
        %533 = vmatprep.subr.bf16.mxu0 0
        %534 = vmatpush1.bf16.msra.mxu0 0
        %535 = vmatprep.subr.bf16.mxu0 0
        %536 = vmatpush1.bf16.msra.mxu0 0
        %537 = vmatprep.subr.bf16.mxu0 0
        %538 = vmatpush1.bf16.msra.mxu0 0
        %539 = vmatprep.subr.bf16.mxu0 0
        %540 = vmatpush1.bf16.msra.mxu0 0
        %541 = vmatprep.subr.bf16.mxu0 0
        %542 = vmatpush1.bf16.msra.mxu0 0
        %543 = vmatprep.subr.bf16.mxu0 0
        %544 = vmatpush1.bf16.msra.mxu0 0
        %545 = vmatprep.subr.bf16.mxu0 0
        %546 = vmatpush1.bf16.msra.mxu0 0
        %547 = vmatprep.subr.bf16.mxu0 0
        %548 = vmatpush1.bf16.msra.mxu0 0
        %549 = vmatprep.subr.bf16.mxu0 0
        %550 = vmatpush1.bf16.msra.mxu0 0
        %551 = vmatprep.mubr.bf16.mxu0 0
        %552 = vmatmul.mubr.bf16.gmra.mrb[0].mxu0 %v517
        %v553 = vpop.f32.mrb[0].mxu0
        %v554 = vadd.f32 0.0, %v553
        %v555 = vpop.f32.mrb[0].mxu0
        %v556 = vpop.f32.mrb[0].mxu0
        %v557 = vpop.f32.mrb[0].mxu0
        %558 = vdwg.mxu0
        %v559 = vadd.f32 %v514, %v554
        %v560 = vtanh.pop %v559
        %s561 = scalar_lea.vmem [#allocation2], 16
        %v562 = vld [vmem:[%s561] sm:$0xff]
        %v563 = vpack.c.bf16 %v560, %v560
        %v565 = vsel %vm365, %v563, 0
        %567 = vmatprep.subr.bf16.mxu0 0
        %568 = vmatpush1.bf16.msra.mxu0 %v464
        %569 = vmatprep.subr.bf16.mxu0 0
        %570 = vmatpush1.bf16.msra.mxu0 %v465
        %571 = vmatprep.subr.bf16.mxu0 0
        %572 = vmatpush1.bf16.msra.mxu0 0
        %573 = vmatprep.subr.bf16.mxu0 0
        %574 = vmatpush1.bf16.msra.mxu0 0
        %575 = vmatprep.subr.bf16.mxu0 0
        %576 = vmatpush1.bf16.msra.mxu0 0
        %577 = vmatprep.subr.bf16.mxu0 0
        %578 = vmatpush1.bf16.msra.mxu0 0
        %579 = vmatprep.subr.bf16.mxu0 0
        %580 = vmatpush1.bf16.msra.mxu0 0
        %581 = vmatprep.subr.bf16.mxu0 0
        %582 = vmatpush1.bf16.msra.mxu0 0
        %583 = vmatprep.subr.bf16.mxu0 0
        %584 = vmatpush1.bf16.msra.mxu0 0
        %585 = vmatprep.subr.bf16.mxu0 0
        %586 = vmatpush1.bf16.msra.mxu0 0
        %587 = vmatprep.subr.bf16.mxu0 0
        %588 = vmatpush1.bf16.msra.mxu0 0
        %589 = vmatprep.subr.bf16.mxu0 0
        %590 = vmatpush1.bf16.msra.mxu0 0
        %591 = vmatprep.subr.bf16.mxu0 0
        %592 = vmatpush1.bf16.msra.mxu0 0
        %593 = vmatprep.subr.bf16.mxu0 0
        %594 = vmatpush1.bf16.msra.mxu0 0
        %595 = vmatprep.subr.bf16.mxu0 0
        %596 = vmatpush1.bf16.msra.mxu0 0
        %597 = vmatprep.subr.bf16.mxu0 0
        %598 = vmatpush1.bf16.msra.mxu0 0
        %599 = vmatprep.mubr.bf16.mxu0 0
        %600 = vmatmul.mubr.bf16.gmra.mrb[0].mxu0 %v565
        %v601 = vpop.f32.mrb[0].mxu0
        %v602 = vadd.f32 0.0, %v601
        %v603 = vpop.f32.mrb[0].mxu0
        %v604 = vpop.f32.mrb[0].mxu0
        %v605 = vpop.f32.mrb[0].mxu0
        %606 = vdwg.mxu0
        %v607 = vadd.f32 %v562, %v602
        %v608 = vtanh.pop %v607
        %s609 = scalar_lea.vmem [#allocation2], 24
        %v610 = vld [vmem:[%s609] sm:$0xff]
        %v611 = vpack.c.bf16 %v608, %v608
        %v613 = vsel %vm365, %v611, 0
        %615 = vmatprep.subr.bf16.mxu0 0
        %616 = vmatpush1.bf16.msra.mxu0 %v464
        %617 = vmatprep.subr.bf16.mxu0 0
        %618 = vmatpush1.bf16.msra.mxu0 %v465
        %619 = vmatprep.subr.bf16.mxu0 0
        %620 = vmatpush1.bf16.msra.mxu0 0
        %621 = vmatprep.subr.bf16.mxu0 0
        %622 = vmatpush1.bf16.msra.mxu0 0
        %623 = vmatprep.subr.bf16.mxu0 0
        %624 = vmatpush1.bf16.msra.mxu0 0
        %625 = vmatprep.subr.bf16.mxu0 0
        %626 = vmatpush1.bf16.msra.mxu0 0
        %627 = vmatprep.subr.bf16.mxu0 0
        %628 = vmatpush1.bf16.msra.mxu0 0
        %629 = vmatprep.subr.bf16.mxu0 0
        %630 = vmatpush1.bf16.msra.mxu0 0
        %631 = vmatprep.subr.bf16.mxu0 0
        %632 = vmatpush1.bf16.msra.mxu0 0
        %633 = vmatprep.subr.bf16.mxu0 0
        %634 = vmatpush1.bf16.msra.mxu0 0
        %635 = vmatprep.subr.bf16.mxu0 0
        %636 = vmatpush1.bf16.msra.mxu0 0
        %637 = vmatprep.subr.bf16.mxu0 0
        %638 = vmatpush1.bf16.msra.mxu0 0
        %639 = vmatprep.subr.bf16.mxu0 0
        %640 = vmatpush1.bf16.msra.mxu0 0
        %641 = vmatprep.subr.bf16.mxu0 0
        %642 = vmatpush1.bf16.msra.mxu0 0
        %643 = vmatprep.subr.bf16.mxu0 0
        %644 = vmatpush1.bf16.msra.mxu0 0
        %645 = vmatprep.subr.bf16.mxu0 0
        %646 = vmatpush1.bf16.msra.mxu0 0
        %647 = vmatprep.mubr.bf16.mxu0 0
        %648 = vmatmul.mubr.bf16.gmra.mrb[0].mxu0 %v613
        %v649 = vpop.f32.mrb[0].mxu0
        %v650 = vadd.f32 0.0, %v649
        %v651 = vpop.f32.mrb[0].mxu0
        %v652 = vpop.f32.mrb[0].mxu0
        %v653 = vpop.f32.mrb[0].mxu0
        %654 = vdwg.mxu0
        %v655 = vadd.f32 %v610, %v650
        %v656 = vtanh.pop %v655
        %s657 = scalar_lea.vmem [#allocation2], 32
        %v658 = vld [vmem:[%s657] sm:$0xff]
        %v659 = vpack.c.bf16 %v656, %v656
        %v661 = vsel %vm365, %v659, 0
        %663 = vmatprep.subr.bf16.mxu0 0
        %664 = vmatpush1.bf16.msra.mxu0 %v464
        %665 = vmatprep.subr.bf16.mxu0 0
        %666 = vmatpush1.bf16.msra.mxu0 %v465
        %667 = vmatprep.subr.bf16.mxu0 0
        %668 = vmatpush1.bf16.msra.mxu0 0
        %669 = vmatprep.subr.bf16.mxu0 0
        %670 = vmatpush1.bf16.msra.mxu0 0
        %671 = vmatprep.subr.bf16.mxu0 0
        %672 = vmatpush1.bf16.msra.mxu0 0
        %673 = vmatprep.subr.bf16.mxu0 0
        %674 = vmatpush1.bf16.msra.mxu0 0
        %675 = vmatprep.subr.bf16.mxu0 0
        %676 = vmatpush1.bf16.msra.mxu0 0
        %677 = vmatprep.subr.bf16.mxu0 0
        %678 = vmatpush1.bf16.msra.mxu0 0
        %679 = vmatprep.subr.bf16.mxu0 0
        %680 = vmatpush1.bf16.msra.mxu0 0
        %681 = vmatprep.subr.bf16.mxu0 0
        %682 = vmatpush1.bf16.msra.mxu0 0
        %683 = vmatprep.subr.bf16.mxu0 0
        %684 = vmatpush1.bf16.msra.mxu0 0
        %685 = vmatprep.subr.bf16.mxu0 0
        %686 = vmatpush1.bf16.msra.mxu0 0
        %687 = vmatprep.subr.bf16.mxu0 0
        %688 = vmatpush1.bf16.msra.mxu0 0
        %689 = vmatprep.subr.bf16.mxu0 0
        %690 = vmatpush1.bf16.msra.mxu0 0
        %691 = vmatprep.subr.bf16.mxu0 0
        %692 = vmatpush1.bf16.msra.mxu0 0
        %693 = vmatprep.subr.bf16.mxu0 0
        %694 = vmatpush1.bf16.msra.mxu0 0
        %695 = vmatprep.mubr.bf16.mxu0 0
        %696 = vmatmul.mubr.bf16.gmra.mrb[0].mxu0 %v661
        %v697 = vpop.f32.mrb[0].mxu0
        %v698 = vadd.f32 0.0, %v697
        %v699 = vpop.f32.mrb[0].mxu0
        %v700 = vpop.f32.mrb[0].mxu0
        %v701 = vpop.f32.mrb[0].mxu0
        %702 = vdwg.mxu0
        %v703 = vadd.f32 %v658, %v698
        %v704 = vtanh.pop %v703
        %s705 = scalar_lea.vmem [#allocation2], 40
        %v706 = vld [vmem:[%s705] sm:$0xff]
        %v707 = vpack.c.bf16 %v704, %v704
        %v709 = vsel %vm365, %v707, 0
        %711 = vmatprep.subr.bf16.mxu0 0
        %712 = vmatpush1.bf16.msra.mxu0 %v464
        %713 = vmatprep.subr.bf16.mxu0 0
        %714 = vmatpush1.bf16.msra.mxu0 %v465
        %715 = vmatprep.subr.bf16.mxu0 0
        %716 = vmatpush1.bf16.msra.mxu0 0
        %717 = vmatprep.subr.bf16.mxu0 0
        %718 = vmatpush1.bf16.msra.mxu0 0
        %719 = vmatprep.subr.bf16.mxu0 0
        %720 = vmatpush1.bf16.msra.mxu0 0
        %721 = vmatprep.subr.bf16.mxu0 0
        %722 = vmatpush1.bf16.msra.mxu0 0
        %723 = vmatprep.subr.bf16.mxu0 0
        %724 = vmatpush1.bf16.msra.mxu0 0
        %725 = vmatprep.subr.bf16.mxu0 0
        %726 = vmatpush1.bf16.msra.mxu0 0
        %727 = vmatprep.subr.bf16.mxu0 0
        %728 = vmatpush1.bf16.msra.mxu0 0
        %729 = vmatprep.subr.bf16.mxu0 0
        %730 = vmatpush1.bf16.msra.mxu0 0
        %731 = vmatprep.subr.bf16.mxu0 0
        %732 = vmatpush1.bf16.msra.mxu0 0
        %733 = vmatprep.subr.bf16.mxu0 0
        %734 = vmatpush1.bf16.msra.mxu0 0
        %735 = vmatprep.subr.bf16.mxu0 0
        %736 = vmatpush1.bf16.msra.mxu0 0
        %737 = vmatprep.subr.bf16.mxu0 0
        %738 = vmatpush1.bf16.msra.mxu0 0
        %739 = vmatprep.subr.bf16.mxu0 0
        %740 = vmatpush1.bf16.msra.mxu0 0
        %741 = vmatprep.subr.bf16.mxu0 0
        %742 = vmatpush1.bf16.msra.mxu0 0
        %743 = vmatprep.mubr.bf16.mxu0 0
        %744 = vmatmul.mubr.bf16.gmra.mrb[0].mxu0 %v709
        %v745 = vpop.f32.mrb[0].mxu0
        %v746 = vadd.f32 0.0, %v745
        %v747 = vpop.f32.mrb[0].mxu0
        %v748 = vpop.f32.mrb[0].mxu0
        %v749 = vpop.f32.mrb[0].mxu0
        %750 = vdwg.mxu0
        %v751 = vadd.f32 %v706, %v746
        %v752 = vtanh.pop %v751
        %s753 = scalar_lea.vmem [#allocation2], 48
        %v754 = vld [vmem:[%s753] sm:$0xff]
        %v755 = vpack.c.bf16 %v752, %v752
        %v757 = vsel %vm365, %v755, 0
        %759 = vmatprep.subr.bf16.mxu0 0
        %760 = vmatpush1.bf16.msra.mxu0 %v464
        %761 = vmatprep.subr.bf16.mxu0 0
        %762 = vmatpush1.bf16.msra.mxu0 %v465
        %763 = vmatprep.subr.bf16.mxu0 0
        %764 = vmatpush1.bf16.msra.mxu0 0
        %765 = vmatprep.subr.bf16.mxu0 0
        %766 = vmatpush1.bf16.msra.mxu0 0
        %767 = vmatprep.subr.bf16.mxu0 0
        %768 = vmatpush1.bf16.msra.mxu0 0
        %769 = vmatprep.subr.bf16.mxu0 0
        %770 = vmatpush1.bf16.msra.mxu0 0
        %771 = vmatprep.subr.bf16.mxu0 0
        %772 = vmatpush1.bf16.msra.mxu0 0
        %773 = vmatprep.subr.bf16.mxu0 0
        %774 = vmatpush1.bf16.msra.mxu0 0
        %775 = vmatprep.subr.bf16.mxu0 0
        %776 = vmatpush1.bf16.msra.mxu0 0
        %777 = vmatprep.subr.bf16.mxu0 0
        %778 = vmatpush1.bf16.msra.mxu0 0
        %779 = vmatprep.subr.bf16.mxu0 0
        %780 = vmatpush1.bf16.msra.mxu0 0
        %781 = vmatprep.subr.bf16.mxu0 0
        %782 = vmatpush1.bf16.msra.mxu0 0
        %783 = vmatprep.subr.bf16.mxu0 0
        %784 = vmatpush1.bf16.msra.mxu0 0
        %785 = vmatprep.subr.bf16.mxu0 0
        %786 = vmatpush1.bf16.msra.mxu0 0
        %787 = vmatprep.subr.bf16.mxu0 0
        %788 = vmatpush1.bf16.msra.mxu0 0
        %789 = vmatprep.subr.bf16.mxu0 0
        %790 = vmatpush1.bf16.msra.mxu0 0
        %791 = vmatprep.mubr.bf16.mxu0 0
        %792 = vmatmul.mubr.bf16.gmra.mrb[0].mxu0 %v757
        %v793 = vpop.f32.mrb[0].mxu0
        %v794 = vadd.f32 0.0, %v793
        %v795 = vpop.f32.mrb[0].mxu0
        %v796 = vpop.f32.mrb[0].mxu0
        %v797 = vpop.f32.mrb[0].mxu0
        %798 = vdwg.mxu0
        %v799 = vadd.f32 %v754, %v794
        %v800 = vtanh.pop %v799
        %s801 = scalar_lea.vmem [#allocation2], 56
        %v802 = vld [vmem:[%s801] sm:$0xff]
        %v803 = vpack.c.bf16 %v800, %v800
        %v805 = vsel %vm365, %v803, 0
        %807 = vmatprep.subr.bf16.mxu0 0
        %808 = vmatpush1.bf16.msra.mxu0 %v464
        %809 = vmatprep.subr.bf16.mxu0 0
        %810 = vmatpush1.bf16.msra.mxu0 %v465
        %811 = vmatprep.subr.bf16.mxu0 0
        %812 = vmatpush1.bf16.msra.mxu0 0
        %813 = vmatprep.subr.bf16.mxu0 0
        %814 = vmatpush1.bf16.msra.mxu0 0
        %815 = vmatprep.subr.bf16.mxu0 0
        %816 = vmatpush1.bf16.msra.mxu0 0
        %817 = vmatprep.subr.bf16.mxu0 0
        %818 = vmatpush1.bf16.msra.mxu0 0
        %819 = vmatprep.subr.bf16.mxu0 0
        %820 = vmatpush1.bf16.msra.mxu0 0
        %821 = vmatprep.subr.bf16.mxu0 0
        %822 = vmatpush1.bf16.msra.mxu0 0
        %823 = vmatprep.subr.bf16.mxu0 0
        %824 = vmatpush1.bf16.msra.mxu0 0
        %825 = vmatprep.subr.bf16.mxu0 0
        %826 = vmatpush1.bf16.msra.mxu0 0
        %827 = vmatprep.subr.bf16.mxu0 0
        %828 = vmatpush1.bf16.msra.mxu0 0
        %829 = vmatprep.subr.bf16.mxu0 0
        %830 = vmatpush1.bf16.msra.mxu0 0
        %831 = vmatprep.subr.bf16.mxu0 0
        %832 = vmatpush1.bf16.msra.mxu0 0
        %833 = vmatprep.subr.bf16.mxu0 0
        %834 = vmatpush1.bf16.msra.mxu0 0
        %835 = vmatprep.subr.bf16.mxu0 0
        %836 = vmatpush1.bf16.msra.mxu0 0
        %837 = vmatprep.subr.bf16.mxu0 0
        %838 = vmatpush1.bf16.msra.mxu0 0
        %839 = vmatprep.mubr.bf16.mxu0 0
        %840 = vmatmul.mubr.bf16.gmra.mrb[0].mxu0 %v805
        %v841 = vpop.f32.mrb[0].mxu0
        %v842 = vadd.f32 0.0, %v841
        %v843 = vpop.f32.mrb[0].mxu0
        %v844 = vpop.f32.mrb[0].mxu0
        %v845 = vpop.f32.mrb[0].mxu0
        %846 = vdwg.mxu0
        %v847 = vadd.f32 %v802, %v842
        %v848 = vtanh.pop %v847
        %v849 = vpack.c.bf16 %v848, %v848
        %v850 = vld [vmem:[#allocation9] sm:$0xf]
        %v851 = vld [vmem:[#allocation9 + $0x4] sm:$0xf]
        %v852 = vld [vmem:[#allocation9 + $0x8] sm:$0xf]
        %v853 = vld [vmem:[#allocation9 + $0xc] sm:$0xf]
        %v854 = vld [vmem:[%s5] sm:$0x1]
        %v856 = vlaneseq
        %v857 = vshrl.u32 %v856, 7
        %v858 = vsub.s32 0, %v857
        %v859 = vrot.slane %v854, %v858
        %v865 = vunpack.c.l.b16 %v850
        %v866 = vunpack.c.l.b16 %v851
        %v867 = vunpack.c.l.b16 %v852
        %v868 = vunpack.c.l.b16 %v853
        %v869 = vpack.c.b16 %v866, %v865
        %v870 = vpack.c.b16 %v868, %v867
        %v874 = vsel %vm365, %v849, 0
        %876 = vmatprep.subr.bf16.mxu0 0
        %877 = vmatpush1.bf16.msra.mxu0 %v869
        %878 = vmatprep.subr.bf16.mxu0 0
        %879 = vmatpush1.bf16.msra.mxu0 %v870
        %880 = vmatprep.subr.bf16.mxu0 0
        %881 = vmatpush1.bf16.msra.mxu0 0
        %882 = vmatprep.subr.bf16.mxu0 0
        %883 = vmatpush1.bf16.msra.mxu0 0
        %884 = vmatprep.subr.bf16.mxu0 0
        %885 = vmatpush1.bf16.msra.mxu0 0
        %886 = vmatprep.subr.bf16.mxu0 0
        %887 = vmatpush1.bf16.msra.mxu0 0
        %888 = vmatprep.subr.bf16.mxu0 0
        %889 = vmatpush1.bf16.msra.mxu0 0
        %890 = vmatprep.subr.bf16.mxu0 0
        %891 = vmatpush1.bf16.msra.mxu0 0
        %892 = vmatprep.subr.bf16.mxu0 0
        %893 = vmatpush1.bf16.msra.mxu0 0
        %894 = vmatprep.subr.bf16.mxu0 0
        %895 = vmatpush1.bf16.msra.mxu0 0
        %896 = vmatprep.subr.bf16.mxu0 0
        %897 = vmatpush1.bf16.msra.mxu0 0
        %898 = vmatprep.subr.bf16.mxu0 0
        %899 = vmatpush1.bf16.msra.mxu0 0
        %900 = vmatprep.subr.bf16.mxu0 0
        %901 = vmatpush1.bf16.msra.mxu0 0
        %902 = vmatprep.subr.bf16.mxu0 0
        %903 = vmatpush1.bf16.msra.mxu0 0
        %904 = vmatprep.subr.bf16.mxu0 0
        %905 = vmatpush1.bf16.msra.mxu0 0
        %906 = vmatprep.subr.bf16.mxu0 0
        %907 = vmatpush1.bf16.msra.mxu0 0
        %908 = vmatprep.mubr.bf16.mxu0 0
        %909 = vmatmul.mubr.bf16.gmra.mrb[0].mxu0 %v874
        %v910 = vpop.f32.mrb[0].mxu0
        %v911 = vadd.f32 %v859, %v910
        %v912 = vpop.f32.mrb[0].mxu0
        %v913 = vpop.f32.mrb[0].mxu0
        %v914 = vpop.f32.mrb[0].mxu0
        %915 = vdwg.mxu0
        %916 = vst [vmem:[%s312] sm:$0xff] %v911
        %s917 = sand.u32 %s164, 1
        %s918 = scalar_lea.sflag [#allocation5], %s917
        %s919 = sand.u32 %s164, 1
        %s920 = smul.addr %s919, 8
        %s921 = scalar_lea.vmem [#allocation11], %s920
        // Predicated region
        $region61: #{tpu_custom_call.1} parent=43 // pred_check
          %p922 = pneg %p174
        $region62: #{tpu_custom_call.1} parent=43 // pred_check_branch
          %924 = sbr.rel (%p922) target = $region64
        $region63: #{tpu_custom_call.1} parent=43 // pred_region
          %s926 = ssub.s32 128, 128
          %927 = vsyncadd %s918, %s926
          %s928 = smul.addr %s25, 128
          %s929 = scalar_lea.hbm %s6, %s928
          %s931 = sshll.u32 %s921, 4
          %s932 = int_to_ptr.vmem [resolvable:$true] %s931
          %934 = dma.vmem_to_hbm [thread:$0]  %s932, 128, %s929, %s918
        $region64: #{tpu_custom_call.1} parent=43 // pred_fallthru
          _
      $region44: #{tpu_custom_call.1} parent=5 // pred_fallthru
        _
      %p935 = scmp.le.s32.totalorder 2, %s20
      // Predicated region
      $region65: #{tpu_custom_call.1} parent=5 // pred_check
        %p936 = pneg %p935
      $region66: #{tpu_custom_call.1} parent=5 // pred_check_branch
        %938 = sbr.rel (%p936) target = $region68
      $region67: #{tpu_custom_call.1} parent=5 // pred_region
        %s939 = ssub.s32 %s20, 2
        // Predicated region
        $region69: #{tpu_custom_call.1} parent=67 // pred_check
          %p940 = pneg %p180
        $region70: #{tpu_custom_call.1} parent=67 // pred_check_branch
          %942 = sbr.rel (%p940) target = $region72
        $region71: #{tpu_custom_call.1} parent=67 // pred_region
          %s943 = sand.u32 %s165, 1
          %s944 = scalar_lea.sflag [#allocation5], %s943
          %s945 = sand.u32 %s165, 1
          %s946 = smul.addr %s945, 8
          %s947 = scalar_lea.vmem [#allocation11], %s946
          %948 = dma.done %s944, 128
        $region72: #{tpu_custom_call.1} parent=67 // pred_fallthru
          _
      $region68: #{tpu_custom_call.1} parent=5 // pred_fallthru
        _
    $region6: #{tpu_custom_call.1} parent=1 // loop_footer
      %s24 = sadd.s32 1, %s20
    $region7: #{tpu_custom_call.1} parent=1 // loop_footer_branch
      %19 = sbr.rel target = $region3
    $region8: #{tpu_custom_call.1} parent=1 // loop_exit
      _
    %949 = vsyncpa [#allocation4], 1
    %s950 = scalar_lea.sflag [#allocation4], 1
    %951 = vsyncpa %s950, 1
    %952 = vsyncpa [#allocation7], 1
    %953 = vsyncpa [#allocation10], 1
    %954 = vsyncpa [#allocation5], 1
    %s955 = scalar_lea.sflag [#allocation5], 1
    %956 = vsyncpa %s955, 1

</llo_original>
